<compile_context>
chip_gen: v6e
topology: v6e:2x2x1
jax: 0.10.0
libtpu: 0.0.40
codegen_flags: <defaults>
</compile_context>

<pallas_src>
import math

import jax
import jax.numpy as jnp
import numpy as np
from jax.experimental import pallas as pl
from jax.experimental.pallas import tpu as pltpu


def sentinel_kernel(act_ref, w_ref, out_ref):
    # act_ref: [N, Dx+2*Dh]  (columns: [x | h | cell])
    # w_ref:   [Dx+Dh, Dh]   (stacked [Wx.T; Wh.T])
    # out_ref: [N, Dh]
    k = w_ref.shape[0]          # Dx + Dh   (static at trace time)
    dh = w_ref.shape[1]         # Dh

    act = act_ref[...]
    xh = act[:, :k]             # [N, Dx+Dh]
    cell = act[:, k:k + dh]     # [N, Dh]

    pre = jnp.dot(xh, w_ref[...], preferred_element_type=jnp.float32)
    # sigmoid(x) = 0.5 * (tanh(0.5 * x) + 1)  -- one EUP tanh + one VPU FMA.
    gate = 0.5 * (jnp.tanh(0.5 * pre) + 1.0)
    out_ref[...] = (gate * jnp.tanh(cell)).astype(out_ref.dtype)


def _sentinel_pallas(act, W):
    N = act.shape[0]
    K, Dh = W.shape
    itemsize = 4  # f32
    cost = pl.CostEstimate(
        flops=2 * N * K * Dh + 4 * N * Dh,
        transcendentals=2 * N * Dh,                       # tanh(pre), tanh(cell)
        bytes_accessed=(act.size + W.size + N * Dh) * itemsize,
    )
    return pl.pallas_call(
        sentinel_kernel,
        out_shape=jax.ShapeDtypeStruct((N, Dh), jnp.float32),
        in_specs=[
            pl.BlockSpec(memory_space=pltpu.MemorySpace.VMEM),  # activation slab
            pl.BlockSpec(memory_space=pltpu.MemorySpace.VMEM),  # stacked weight
        ],
        out_specs=pl.BlockSpec(memory_space=pltpu.MemorySpace.VMEM),
        cost_estimate=cost,
    )(act, W)


@jax.jit
def sentinel_forward(x_t, h_t_1, cell_t, W):
    """x_t: [B, T, Dx]; h_t_1, cell_t: [B, T, Dh]; W: [Dx+Dh, Dh] (stacked)."""
    B, T, Dx = x_t.shape
    Dh = h_t_1.shape[-1]
    N = B * T
    # One contiguous activation slab [N, Dx + 2*Dh] = [x | h | cell]; a single
    # input DMA into the kernel, split with static slices inside.
    act = jnp.concatenate(
        [x_t.reshape(N, Dx), h_t_1.reshape(N, Dh), cell_t.reshape(N, Dh)],
        axis=-1)
    out = _sentinel_pallas(act, W)
    return out.reshape(B, T, Dh)


def xavier_uniform(key, shape):
    # PyTorch init.xavier_uniform on weight [out, in]: bound = sqrt(6/(in+out))
    fan_out, fan_in = shape
    bound = math.sqrt(6.0 / (fan_in + fan_out))
    return jax.random.uniform(key, shape, jnp.float32, -bound, bound)


def reference_forward(x_t, h_t_1, cell_t, WxT, WhT):
    # Pure-JAX reference mirroring the PyTorch module (eval mode).
    gate = jax.nn.sigmoid(
        jnp.dot(x_t, WxT, precision=jax.lax.Precision.HIGHEST)
        + jnp.dot(h_t_1, WhT, precision=jax.lax.Precision.HIGHEST))
    return gate * jnp.tanh(cell_t)


if __name__ == "__main__":
    B, T = 2, 8                       # batch, seq
    input_size, hidden_size = 64, 32  # Dx, Dh

    key = jax.random.PRNGKey(0)
    k1, k2, k3, k4, k5 = jax.random.split(key, 5)

    x_t = jax.random.normal(k1, (B, T, input_size), jnp.float32)
    h_t_1 = jax.random.normal(k2, (B, T, hidden_size), jnp.float32)
    cell_t = jax.random.normal(k3, (B, T, hidden_size), jnp.float32)

    # PyTorch Linear weights are [out_features, in_features]; transpose so the
    # kernel computes x @ W, then stack once into the fused parameter.
    WxT = xavier_uniform(k4, (hidden_size, input_size)).T   # [Dx, Dh]
    WhT = xavier_uniform(k5, (hidden_size, hidden_size)).T  # [Dh, Dh]
    W = jnp.concatenate([WxT, WhT], axis=0)                 # [Dx+Dh, Dh]

    s_t = sentinel_forward(x_t, h_t_1, cell_t, W)
    jax.block_until_ready(s_t)

    s_ref = reference_forward(x_t, h_t_1, cell_t, WxT, WhT)
    np.testing.assert_allclose(np.asarray(s_t), np.asarray(s_ref),
                               rtol=2e-5, atol=2e-5)

    print("KERNEL_OK")
</pallas_src>

<mosaic_0001>
module attributes {stable_mosaic.version = 11 : i64} {
  func.func @sentinel_kernel(%arg0: memref<16x128xf32, #tpu.memory_space<vmem>>, %arg1: memref<96x32xf32, #tpu.memory_space<vmem>>, %arg2: memref<16x32xf32, #tpu.memory_space<vmem>>) attributes {dimension_semantics = [], scalar_prefetch = 0 : i64, scratch_operands = 0 : i64, tpu.core_type = #tpu.core_type<tc>} {
    %c0 = arith.constant 0 : index
    %c0_0 = arith.constant 0 : index
    %0 = vector.load %arg0[%c0, %c0_0] : memref<16x128xf32, #tpu.memory_space<vmem>>, vector<16x128xf32>
    %1 = vector.extract_strided_slice %0 {offsets = [0, 0], sizes = [16, 96], strides = [1, 1]} : vector<16x128xf32> to vector<16x96xf32>
    %2 = vector.extract_strided_slice %0 {offsets = [0, 96], sizes = [16, 32], strides = [1, 1]} : vector<16x128xf32> to vector<16x32xf32>
    %c0_1 = arith.constant 0 : index
    %c0_2 = arith.constant 0 : index
    %3 = vector.load %arg1[%c0_1, %c0_2] : memref<96x32xf32, #tpu.memory_space<vmem>>, vector<96x32xf32>
    %cst = arith.constant dense<0.000000e+00> : vector<16x32xf32>
    %4 = tpu.matmul %1, %3, %cst {dimension_numbers = #tpu.dot_dimension_numbers<[1], [0], [0], [1], [0, 0, 1, 1], [], []>} : vector<16x96xf32>, vector<96x32xf32>, vector<16x32xf32> -> vector<16x32xf32>
    %cst_3 = arith.constant 5.000000e-01 : f32
    %5 = vector.broadcast %cst_3 : f32 to vector<16x32xf32>
    %6 = arith.mulf %5, %4 : vector<16x32xf32>
    %7 = math.tanh %6 : vector<16x32xf32>
    %cst_4 = arith.constant 1.000000e+00 : f32
    %8 = vector.broadcast %cst_4 : f32 to vector<16x32xf32>
    %9 = arith.addf %7, %8 : vector<16x32xf32>
    %cst_5 = arith.constant 5.000000e-01 : f32
    %10 = vector.broadcast %cst_5 : f32 to vector<16x32xf32>
    %11 = arith.mulf %10, %9 : vector<16x32xf32>
    %12 = math.tanh %2 : vector<16x32xf32>
    %13 = arith.mulf %11, %12 : vector<16x32xf32>
    %c0_6 = arith.constant 0 : index
    %c0_7 = arith.constant 0 : index
    %14 = vector.load %arg2[%c0_6, %c0_7] : memref<16x32xf32, #tpu.memory_space<vmem>>, vector<16x32xf32>
    tpu.vector_store %arg2[%c0_6, %c0_7], %13 {strides = array<i32>} : memref<16x32xf32, #tpu.memory_space<vmem>>, vector<16x32xf32>,
    return
  }
}

</mosaic_0001>

<llo_original>
// kernel: sentinel_forward.1
$region0: #{sentinel_forward.1}
  #allocation0 [shape = 'u32[]', space=smem, size = 0x4, offset = 0x4, fixed_abs, tag = 'smem constant byte address 0x4 - core index']
  #allocation1 [shape = 'u32[144,128]{1,0:T(1,128)}', space=vmem, size = 0x12000, scoped, tag = 'internal scratch']
  %s0 = inlined_call_operand.vmem [shape: f32[16,128], index: 0, kind: input, shape index: {}]
  %s1 = inlined_call_operand.vmem [shape: f32[96,32], index: 1, kind: input, shape index: {}]
  %s2 = inlined_call_operand.hbm [shape: f32[16,32], index: 2, kind: output, shape index: {}]
  %s3 = sld [smem:[#allocation0]]
  $region18: #{sentinel_forward.1} parent=0
    _
  %s5 = ssub.s32 1, %s3
  %s6 = scalar_select 0, %s5, %s3
  $region1: #{sentinel_forward.1} parent=0
    #allocation2 [shape = 'u8[8192]{0}', space=vmem, size = 0x2000, scoped, tag = 'output window, operand 0, single buffered']
    #allocation3 [shape = 's32[1]{0}', space=sflag, size = 0x4, scoped, tag = 'scoped memory for sentinel_forward.1']
    %7 = vsyncpa [#allocation3], 0
    // Predicated region
    $region2: #{sentinel_forward.1} parent=1 // pred_check
      _
    $region3: #{sentinel_forward.1} parent=1 // pred_check_branch
      %9 = sbr.rel (0) target = $region5
    $region4: #{sentinel_forward.1} parent=1 // pred_region
      _
    $region5: #{sentinel_forward.1} parent=1 // pred_fallthru
      _
    // Predicated region
    $region6: #{sentinel_forward.1} parent=1 // pred_check
      _
    $region7: #{sentinel_forward.1} parent=1 // pred_check_branch
      %11 = sbr.rel (0) target = $region9
    $region8: #{sentinel_forward.1} parent=1 // pred_region
      _
    $region9: #{sentinel_forward.1} parent=1 // pred_fallthru
      _
    %v12 = vld [vmem:[%s0] sm:$0xff]
    %v13 = vld [vmem:[%s0 + $0x8] sm:$0xff]
    %v14 = vld [vmem:[%s1] sm:$0xff]
    %v15 = vld [vmem:[%s1 + $0x8] sm:$0xff]
    %v16 = vld [vmem:[%s1 + $0x10] sm:$0xff]
    %v17 = vld [vmem:[%s1 + $0x18] sm:$0xff]
    %v18 = vld [vmem:[%s1 + $0x20] sm:$0xff]
    %v19 = vld [vmem:[%s1 + $0x28] sm:$0xff]
    %v20 = vld [vmem:[%s1 + $0x30] sm:$0xff]
    %v21 = vld [vmem:[%s1 + $0x38] sm:$0xff]
    %v22 = vld [vmem:[%s1 + $0x40] sm:$0xff]
    %v23 = vld [vmem:[%s1 + $0x48] sm:$0xff]
    %v24 = vld [vmem:[%s1 + $0x50] sm:$0xff]
    %v25 = vld [vmem:[%s1 + $0x58] sm:$0xff]
    %vm26 = vcmask 785408
    %v28 = vsel %vm26, %v12, 0
    %v31 = vsel %vm26, %v13, 0
    %33 = vmatprep.subr.mxu0 0.0
    %34 = vmatpush1.msra.mxu0 0.0
    %35 = vmatprep.subr.mxu0 0.0
    %36 = vmatpush1.msra.mxu0 0.0
    %37 = vmatprep.subr.mxu0 0.0
    %38 = vmatpush1.msra.mxu0 0.0
    %39 = vmatprep.subr.mxu0 0.0
    %40 = vmatpush1.msra.mxu0 0.0
    %41 = vmatprep.subr.mxu0 0.0
    %42 = vmatpush1.msra.mxu0 %v25
    %43 = vmatprep.subr.mxu0 0.0
    %44 = vmatpush1.msra.mxu0 %v24
    %45 = vmatprep.subr.mxu0 0.0
    %46 = vmatpush1.msra.mxu0 %v23
    %47 = vmatprep.subr.mxu0 0.0
    %48 = vmatpush1.msra.mxu0 %v22
    %49 = vmatprep.subr.mxu0 0.0
    %50 = vmatpush1.msra.mxu0 %v21
    %51 = vmatprep.subr.mxu0 0.0
    %52 = vmatpush1.msra.mxu0 %v20
    %53 = vmatprep.subr.mxu0 0.0
    %54 = vmatpush1.msra.mxu0 %v19
    %55 = vmatprep.subr.mxu0 0.0
    %56 = vmatpush1.msra.mxu0 %v18
    %57 = vmatprep.subr.mxu0 0.0
    %58 = vmatpush1.msra.mxu0 %v17
    %59 = vmatprep.subr.mxu0 0.0
    %60 = vmatpush1.msra.mxu0 %v16
    %61 = vmatprep.subr.mxu0 0.0
    %62 = vmatpush1.msra.mxu0 %v15
    %63 = vmatprep.subr.mxu0 0.0
    %64 = vmatpush1.msra.mxu0 %v14
    %65 = vmatprep.subr.mxu0 0.0
    %66 = vmatpush2.msra.mxu0 0.0
    %67 = vmatprep.subr.mxu0 0.0
    %68 = vmatpush2.msra.mxu0 0.0
    %69 = vmatprep.subr.mxu0 0.0
    %70 = vmatpush2.msra.mxu0 0.0
    %71 = vmatprep.subr.mxu0 0.0
    %72 = vmatpush2.msra.mxu0 0.0
    %73 = vmatprep.subr.mxu0 0.0
    %74 = vmatpush2.msra.mxu0 0.0
    %75 = vmatprep.subr.mxu0 0.0
    %76 = vmatpush2.msra.mxu0 0.0
    %77 = vmatprep.subr.mxu0 0.0
    %78 = vmatpush2.msra.mxu0 0.0
    %79 = vmatprep.subr.mxu0 0.0
    %80 = vmatpush2.msra.mxu0 0.0
    %81 = vmatprep.subr.mxu0 0.0
    %82 = vmatpush2.msra.mxu0 0.0
    %83 = vmatprep.subr.mxu0 0.0
    %84 = vmatpush2.msra.mxu0 0.0
    %85 = vmatprep.subr.mxu0 0.0
    %86 = vmatpush2.msra.mxu0 0.0
    %87 = vmatprep.subr.mxu0 0.0
    %88 = vmatpush2.msra.mxu0 0.0
    %89 = vmatprep.subr.mxu0 0.0
    %90 = vmatpush2.msra.mxu0 0.0
    %91 = vmatprep.subr.mxu0 0.0
    %92 = vmatpush2.msra.mxu0 0.0
    %93 = vmatprep.subr.mxu0 0.0
    %94 = vmatpush2.msra.mxu0 0.0
    %95 = vmatprep.subr.mxu0 0.0
    %96 = vmatpush2.msra.mxu0 0.0
    %97 = vmatprep.mubr.f32.mxu0 0.0
    %98 = vmatmul.mubr.f32.gmra.mxu0 %v28
    %v99 = vpop.f32.mrf.mxu0
    %v100 = vadd.f32 0.0, %v99
    %v101 = vpop.f32.mrf.mxu0
    %102 = vmatprep.mubr.f32.mxu0 0.0
    %103 = vmatmul.mubr.f32.gmra.mxu0 %v31
    %v104 = vpop.f32.mrf.mxu0
    %v105 = vadd.f32 0.0, %v104
    %v106 = vpop.f32.mrf.mxu0
    %107 = vdwg.mxu0
    %v108 = vmul.f32 %v100, 0.5
    %v109 = vmul.f32 %v105, 0.5
    %v110 = vtanh.pop %v108
    %v111 = vtanh.pop %v109
    %v112 = vadd.f32 %v110, 1.0
    %v113 = vadd.f32 %v111, 1.0
    %v114 = vmul.f32 %v112, 0.5
    %v115 = vmul.f32 %v113, 0.5
    %v116 = vtanh.pop %v12
    %v117 = vtanh.pop %v13
    %120 = vrot.lane.b32.xlu0 %v116, 32
    %v121 = vpop.permute.xlu0 %120
    %122 = vrot.lane.b32.xlu0 %v117, 32
    %v123 = vpop.permute.xlu0 %122
    %v126 = vmul.f32 %v114, %v121
    %v127 = vmul.f32 %v115, %v123
    %vm128 = vcmask 261120
    %129 = vst.msk [vmem:[#allocation2] sm:$0xff] %vm128, %v126
    %130 = vst.msk [vmem:[#allocation2 + $0x8] sm:$0xff] %vm128, %v127
    // Predicated region
    $region10: #{sentinel_forward.1} parent=1 // pred_check
      _
    $region11: #{sentinel_forward.1} parent=1 // pred_check_branch
      %132 = sbr.rel (0) target = $region13
    $region12: #{sentinel_forward.1} parent=1 // pred_region
      %s134 = ssub.s32 256, 256
      %135 = vsyncadd [#allocation3], %s134
      %s136 = sshll.u32 [#allocation2], 4
      %s137 = int_to_ptr.vmem [resolvable:$true] %s136
      %142 = dma.vmem_to_hbm [thread:$0]  %s137, 256, %s2, [#allocation3], 128, 128, 8
    $region13: #{sentinel_forward.1} parent=1 // pred_fallthru
      _
    // Predicated region
    $region14: #{sentinel_forward.1} parent=1 // pred_check
      _
    $region15: #{sentinel_forward.1} parent=1 // pred_check_branch
      %144 = sbr.rel (0) target = $region17
    $region16: #{sentinel_forward.1} parent=1 // pred_region
      %145 = dma.done [#allocation3], 256
    $region17: #{sentinel_forward.1} parent=1 // pred_fallthru
      _
    %146 = vsyncpa [#allocation3], 1

</llo_original>
